<compile_context>
chip_gen: v7x
topology: tpu7x:2x2x1
jax: 0.10.0
libtpu: 0.0.40
codegen_flags: <defaults>
</compile_context>

<pallas_src>
import math

import jax
import jax.numpy as jnp
from jax.experimental import pallas as pl
from jax.experimental.pallas import tpu as pltpu


# ---------------------------------------------------------------------------
# Layout / budget helpers (all reshapes are free collapses of contiguous arrays).
# ---------------------------------------------------------------------------
def _sublane_multiple(dtype):
    """Packed-dtype sublane multiple: f32 -> 8, bf16/f16 -> 16, int8/fp8 -> 32."""
    itemsize = jnp.dtype(dtype).itemsize
    return max(8, 8 * (4 // max(1, itemsize)))


def _dense_2d_view_shape(shape):
    """Pick a lane-dense (rows, cols) view of a contiguous array.

    cols is the SMALLEST multiple of 128 dividing the element count (maximizes rows,
    fully packed (8,128) tiles); otherwise fall back to the natural last dim so the
    slab remains row-tilable (last block dim == full array extent is legal)."""
    n = math.prod(shape)
    for cols in (128, 256, 512, 1024):
        if n % cols == 0:
            return n // cols, cols
    last = int(shape[-1])
    return n // last, last


def _vmem_budget():
    """(per-block byte budget, vmem_limit_bytes) chosen from VMEM capacity."""
    try:
        cap = pltpu.get_tpu_info().vmem_capacity_bytes
    except Exception:
        cap = 64 << 20
    if cap >= (96 << 20):          # v5e / v6e: 128 MiB VMEM
        return 2 << 20, 80 << 20   # 2 MiB blocks; 9 refs x 2 bufs x 2 MiB = 36 MiB
    return (3 << 19), 48 << 20     # v7x: 64 MiB VMEM -> 1.5 MiB blocks, 48 MiB limit


def _pick_row_tile(rows, cols, dtype, max_block_bytes):
    """Largest sublane-aligned row tile under the per-block budget (full array if it fits)."""
    itemsize = jnp.dtype(dtype).itemsize
    if rows * cols * itemsize <= max_block_bytes:
        return rows  # full array -> always a legal block shape
    sub = _sublane_multiple(dtype)
    tile = (max_block_bytes // (cols * itemsize)) // sub * sub
    tile = max(sub, tile)
    return min(tile, rows)


# ---------------------------------------------------------------------------
# Kernel: grouped mean over T logits refs (row-tiled) + T boxes refs (resident).
# ---------------------------------------------------------------------------
def _make_group_mean_kernel(num_layers, num_groups, lg_dtype, bx_dtype, with_boxes):
    q = num_layers // num_groups
    inv_q = 1.0 / float(q)

    def _group_mean(in_refs, out_refs, out_dtype):
        for s in range(num_groups):
            # Unrolled f32 accumulation (q-1 full-vreg VPU adds) + one scale.
            acc = in_refs[s * q][...].astype(jnp.float32)
            for j in range(1, q):
                acc = acc + in_refs[s * q + j][...].astype(jnp.float32)
            out_refs[s][...] = (acc * inv_q).astype(out_dtype)

    if with_boxes:
        def kernel(*refs):
            lg_in = refs[:num_layers]
            bx_in = refs[num_layers:2 * num_layers]
            lg_out = refs[2 * num_layers:2 * num_layers + num_groups]
            bx_out = refs[2 * num_layers + num_groups:]

            # Row-tiled logits grouped mean: runs on every grid step.
            _group_mean(lg_in, lg_out, lg_dtype)

            # Boxes are tiny, grid-resident full-array blocks: compute exactly once.
            @pl.when(pl.program_id(0) == 0)
            def _():
                _group_mean(bx_in, bx_out, bx_dtype)
    else:
        def kernel(*refs):
            _group_mean(refs[:num_layers], refs[num_layers:], lg_dtype)

    return kernel


def _pred_reset_grouped_mean(logits_layers, boxes_layers, num_groups, *,
                             block_budget_bytes=None):
    """Grouped (mean over q consecutive layers) reduction of T logits and T boxes
    layers -> S averaged logits and S averaged boxes, in one pallas_call."""
    num_layers = len(logits_layers)
    assert len(boxes_layers) == num_layers and num_layers % num_groups == 0

    lg_shape, lg_dtype = logits_layers[0].shape, logits_layers[0].dtype
    bx_shape, bx_dtype = boxes_layers[0].shape, boxes_layers[0].dtype
    lg_item = jnp.dtype(lg_dtype).itemsize
    bx_item = jnp.dtype(bx_dtype).itemsize

    default_budget, vmem_limit = _vmem_budget()
    block_budget = block_budget_bytes or default_budget

    lg_rows, lg_cols = _dense_2d_view_shape(lg_shape)
    tile_r = _pick_row_tile(lg_rows, lg_cols, lg_dtype, block_budget)
    grid_r = pl.cdiv(lg_rows, tile_r)

    bx_rows, bx_cols = _dense_2d_view_shape(bx_shape)
    bx_bytes = bx_rows * bx_cols * bx_item
    # Boxes (B*Q*4 elements) are tiny for any DETR config; keep them grid-resident
    # in VMEM as long as they stay well under the per-block budget.
    boxes_resident = bx_bytes <= block_budget // 2

    lg_flat = [x.reshape(lg_rows, lg_cols) for x in logits_layers]
    lg_spec = pl.BlockSpec((tile_r, lg_cols), lambda i: (i, 0))

    in_arrays = list(lg_flat)
    in_specs = [lg_spec] * num_layers
    out_shapes = [jax.ShapeDtypeStruct((lg_rows, lg_cols), lg_dtype)] * num_groups
    out_specs = [lg_spec] * num_groups
    flops = num_layers * lg_rows * lg_cols
    bytes_accessed = (num_layers + num_groups) * lg_rows * lg_cols * lg_item

    if boxes_resident:
        bx_flat = [x.reshape(bx_rows, bx_cols) for x in boxes_layers]
        bx_spec = pl.BlockSpec((bx_rows, bx_cols), lambda i: (0, 0))  # full-array, resident
        in_arrays += bx_flat
        in_specs += [bx_spec] * num_layers
        out_shapes += [jax.ShapeDtypeStruct((bx_rows, bx_cols), bx_dtype)] * num_groups
        out_specs += [bx_spec] * num_groups
        flops += num_layers * bx_rows * bx_cols
        bytes_accessed += (num_layers + num_groups) * bx_bytes

    outs = pl.pallas_call(
        _make_group_mean_kernel(num_layers, num_groups, lg_dtype, bx_dtype,
                                boxes_resident),
        out_shape=tuple(out_shapes),
        grid_spec=pltpu.PrefetchScalarGridSpec(
            num_scalar_prefetch=0,
            grid=(grid_r,),
            in_specs=in_specs,
            out_specs=out_specs,
        ),
        compiler_params=pltpu.CompilerParams(
            # Boxes outputs keep a constant block index across the row axis
            # (grid-resident), so that axis must be "arbitrary" when merged;
            # measured parallel-vs-arbitrary delta on a 1-axis grid is ~0.
            dimension_semantics=("arbitrary",) if boxes_resident else ("parallel",),
            vmem_limit_bytes=vmem_limit,
        ),
        cost_estimate=pl.CostEstimate(
            flops=int(flops), transcendentals=0, bytes_accessed=int(bytes_accessed)),
    )(*in_arrays)

    avg_logits = [o.reshape(lg_shape) for o in outs[:num_groups]]
    if boxes_resident:
        avg_boxes = [o.reshape(bx_shape) for o in outs[num_groups:]]
    else:
        # Pathologically large boxes (would not fit as resident VMEM blocks): the
        # few-MB mean is cheaper in plain XLA than a second dispatch-dominated call.
        q = num_layers // num_groups
        stacked = jnp.stack(boxes_layers, axis=0)
        avg_boxes = [stacked[s * q:(s + 1) * q].mean(axis=0) for s in range(num_groups)]

    return avg_logits, avg_boxes


# ---------------------------------------------------------------------------
# Module wrapper (mirrors PredResetter.forward, without mutating the input dict).
# ---------------------------------------------------------------------------
class PredResetterPallas:
    def __init__(self, num_student_decoder_layers=3, num_teacher_decoder_layers=6,
                 *, block_budget_bytes=None):
        self.num_student_decoder_layers = num_student_decoder_layers
        self.num_teacher_decoder_layers = num_teacher_decoder_layers
        self._block_budget_bytes = block_budget_bytes  # override for testing

    def __call__(self, teacher_outputs):
        S = self.num_student_decoder_layers
        T = self.num_teacher_decoder_layers
        assert T % S == 0
        if T == S:
            return teacher_outputs

        decoder_outputs = list(teacher_outputs['aux_outputs']) + [{
            'pred_logits': teacher_outputs['pred_logits'],
            'pred_boxes': teacher_outputs['pred_boxes'],
        }]
        assert len(decoder_outputs) == T

        logits_layers = [d['pred_logits'] for d in decoder_outputs]
        boxes_layers = [d['pred_boxes'] for d in decoder_outputs]

        avg_logits, avg_boxes = _pred_reset_grouped_mean(
            logits_layers, boxes_layers, S,
            block_budget_bytes=self._block_budget_bytes)

        new_outputs = [
            {'pred_logits': avg_logits[i], 'pred_boxes': avg_boxes[i]}
            for i in range(S)
        ]
        return {
            'aux_outputs': new_outputs[:-1],
            'pred_logits': new_outputs[-1]['pred_logits'],
            'pred_boxes': new_outputs[-1]['pred_boxes'],
        }


if __name__ == "__main__":
    # Small DETR-like shapes: batch=2, queries=32, classes=64, boxes=4.
    B, Q, C = 2, 32, 64
    T, S = 6, 3  # teacher / student decoder layers

    key = jax.random.PRNGKey(0)
    keys = jax.random.split(key, 2 * T)

    layers = []
    for i in range(T):
        logits = jax.random.normal(keys[2 * i], (B, Q, C), dtype=jnp.float32)
        boxes = jax.random.uniform(keys[2 * i + 1], (B, Q, 4), dtype=jnp.float32)
        layers.append({'pred_logits': logits, 'pred_boxes': boxes})

    teacher_outputs = {
        'aux_outputs': layers[:-1],
        'pred_logits': layers[-1]['pred_logits'],
        'pred_boxes': layers[-1]['pred_boxes'],
    }

    # Plain-JAX reference.
    q = T // S
    all_l = jnp.stack([l['pred_logits'] for l in layers], axis=0)
    all_b = jnp.stack([l['pred_boxes'] for l in layers], axis=0)
    ref_l = [all_l[i * q:(i + 1) * q].mean(axis=0) for i in range(S)]
    ref_b = [all_b[i * q:(i + 1) * q].mean(axis=0) for i in range(S)]

    def check(out):
        ok = True
        for i in range(S):
            got_l = out['aux_outputs'][i]['pred_logits'] if i < S - 1 else out['pred_logits']
            got_b = out['aux_outputs'][i]['pred_boxes'] if i < S - 1 else out['pred_boxes']
            jax.block_until_ready(got_l)
            jax.block_until_ready(got_b)
            ok &= bool(jnp.allclose(ref_l[i], got_l, atol=1e-6))
            ok &= bool(jnp.allclose(ref_b[i], got_b, atol=1e-6))
        return ok

    # 1) Default budgets (whole slab fits one block -> grid=(1,)).
    out1 = PredResetterPallas(S, T)(teacher_outputs)
    # 2) Forced tiny block budget -> multi-step row grid, exercising the
    #    grid-resident boxes blocks + pl.when(i==0) path across iterations.
    out2 = PredResetterPallas(S, T, block_budget_bytes=8 * 1024)(teacher_outputs)

    if check(out1) and check(out2):
        print("KERNEL_OK")
    else:
        raise SystemExit("mismatch vs reference")
</pallas_src>

<mosaic_0001>
module attributes {stable_mosaic.version = 11 : i64} {
  func.func @kernel(%arg0: i32, %arg1: memref<32x128xf32, #tpu.memory_space<vmem>>, %arg2: memref<32x128xf32, #tpu.memory_space<vmem>>, %arg3: memref<32x128xf32, #tpu.memory_space<vmem>>, %arg4: memref<32x128xf32, #tpu.memory_space<vmem>>, %arg5: memref<32x128xf32, #tpu.memory_space<vmem>>, %arg6: memref<32x128xf32, #tpu.memory_space<vmem>>, %arg7: memref<2x128xf32, #tpu.memory_space<vmem>>, %arg8: memref<2x128xf32, #tpu.memory_space<vmem>>, %arg9: memref<2x128xf32, #tpu.memory_space<vmem>>, %arg10: memref<2x128xf32, #tpu.memory_space<vmem>>, %arg11: memref<2x128xf32, #tpu.memory_space<vmem>>, %arg12: memref<2x128xf32, #tpu.memory_space<vmem>>, %arg13: memref<32x128xf32, #tpu.memory_space<vmem>>, %arg14: memref<32x128xf32, #tpu.memory_space<vmem>>, %arg15: memref<32x128xf32, #tpu.memory_space<vmem>>, %arg16: memref<2x128xf32, #tpu.memory_space<vmem>>, %arg17: memref<2x128xf32, #tpu.memory_space<vmem>>, %arg18: memref<2x128xf32, #tpu.memory_space<vmem>>) attributes {dimension_semantics = [#tpu.dimension_semantics<arbitrary>], iteration_bounds = array<i64: 1>, scalar_prefetch = 0 : i64, scratch_operands = 0 : i64, tpu.core_type = #tpu.core_type<tc>, window_params = [{transform_indices = @transform_0, window_bounds = array<i64: 32, 128>}, {transform_indices = @transform_1, window_bounds = array<i64: 32, 128>}, {transform_indices = @transform_2, window_bounds = array<i64: 32, 128>}, {transform_indices = @transform_3, window_bounds = array<i64: 32, 128>}, {transform_indices = @transform_4, window_bounds = array<i64: 32, 128>}, {transform_indices = @transform_5, window_bounds = array<i64: 32, 128>}, {pipeline_mode = #tpu.pipeline_mode<synchronous>, transform_indices = @transform_6, window_bounds = array<i64: 2, 128>}, {pipeline_mode = #tpu.pipeline_mode<synchronous>, transform_indices = @transform_7, window_bounds = array<i64: 2, 128>}, {pipeline_mode = #tpu.pipeline_mode<synchronous>, transform_indices = @transform_8, window_bounds = array<i64: 2, 128>}, {pipeline_mode = #tpu.pipeline_mode<synchronous>, transform_indices = @transform_9, window_bounds = array<i64: 2, 128>}, {pipeline_mode = #tpu.pipeline_mode<synchronous>, transform_indices = @transform_10, window_bounds = array<i64: 2, 128>}, {pipeline_mode = #tpu.pipeline_mode<synchronous>, transform_indices = @transform_11, window_bounds = array<i64: 2, 128>}, {transform_indices = @transform_12, window_bounds = array<i64: 32, 128>}, {transform_indices = @transform_13, window_bounds = array<i64: 32, 128>}, {transform_indices = @transform_14, window_bounds = array<i64: 32, 128>}, {pipeline_mode = #tpu.pipeline_mode<synchronous>, transform_indices = @transform_15, window_bounds = array<i64: 2, 128>}, {pipeline_mode = #tpu.pipeline_mode<synchronous>, transform_indices = @transform_16, window_bounds = array<i64: 2, 128>}, {pipeline_mode = #tpu.pipeline_mode<synchronous>, transform_indices = @transform_17, window_bounds = array<i64: 2, 128>}]} {
    %c0 = arith.constant 0 : index
    %c0_0 = arith.constant 0 : index
    %0 = vector.load %arg1[%c0, %c0_0] : memref<32x128xf32, #tpu.memory_space<vmem>>, vector<32x128xf32>
    %c0_1 = arith.constant 0 : index
    %c0_2 = arith.constant 0 : index
    %1 = vector.load %arg2[%c0_1, %c0_2] : memref<32x128xf32, #tpu.memory_space<vmem>>, vector<32x128xf32>
    %2 = arith.addf %0, %1 : vector<32x128xf32>
    %cst = arith.constant 5.000000e-01 : f32
    %3 = vector.broadcast %cst : f32 to vector<32x128xf32>
    %4 = arith.mulf %2, %3 : vector<32x128xf32>
    %c0_3 = arith.constant 0 : index
    %c0_4 = arith.constant 0 : index
    %5 = vector.load %arg13[%c0_3, %c0_4] : memref<32x128xf32, #tpu.memory_space<vmem>>, vector<32x128xf32>
    tpu.vector_store %arg13[%c0_3, %c0_4], %4 {strides = array<i32>} : memref<32x128xf32, #tpu.memory_space<vmem>>, vector<32x128xf32>,
    %c0_5 = arith.constant 0 : index
    %c0_6 = arith.constant 0 : index
    %6 = vector.load %arg3[%c0_5, %c0_6] : memref<32x128xf32, #tpu.memory_space<vmem>>, vector<32x128xf32>
    %c0_7 = arith.constant 0 : index
    %c0_8 = arith.constant 0 : index
    %7 = vector.load %arg4[%c0_7, %c0_8] : memref<32x128xf32, #tpu.memory_space<vmem>>, vector<32x128xf32>
    %8 = arith.addf %6, %7 : vector<32x128xf32>
    %cst_9 = arith.constant 5.000000e-01 : f32
    %9 = vector.broadcast %cst_9 : f32 to vector<32x128xf32>
    %10 = arith.mulf %8, %9 : vector<32x128xf32>
    %c0_10 = arith.constant 0 : index
    %c0_11 = arith.constant 0 : index
    %11 = vector.load %arg14[%c0_10, %c0_11] : memref<32x128xf32, #tpu.memory_space<vmem>>, vector<32x128xf32>
    tpu.vector_store %arg14[%c0_10, %c0_11], %10 {strides = array<i32>} : memref<32x128xf32, #tpu.memory_space<vmem>>, vector<32x128xf32>,
    %c0_12 = arith.constant 0 : index
    %c0_13 = arith.constant 0 : index
    %12 = vector.load %arg5[%c0_12, %c0_13] : memref<32x128xf32, #tpu.memory_space<vmem>>, vector<32x128xf32>
    %c0_14 = arith.constant 0 : index
    %c0_15 = arith.constant 0 : index
    %13 = vector.load %arg6[%c0_14, %c0_15] : memref<32x128xf32, #tpu.memory_space<vmem>>, vector<32x128xf32>
    %14 = arith.addf %12, %13 : vector<32x128xf32>
    %cst_16 = arith.constant 5.000000e-01 : f32
    %15 = vector.broadcast %cst_16 : f32 to vector<32x128xf32>
    %16 = arith.mulf %14, %15 : vector<32x128xf32>
    %c0_17 = arith.constant 0 : index
    %c0_18 = arith.constant 0 : index
    %17 = vector.load %arg15[%c0_17, %c0_18] : memref<32x128xf32, #tpu.memory_space<vmem>>, vector<32x128xf32>
    tpu.vector_store %arg15[%c0_17, %c0_18], %16 {strides = array<i32>} : memref<32x128xf32, #tpu.memory_space<vmem>>, vector<32x128xf32>,
    %c0_i32 = arith.constant 0 : i32
    %18 = arith.cmpi eq, %arg0, %c0_i32 : i32
    %19 = arith.extui %18 : i1 to i32
    %c0_i32_19 = arith.constant 0 : i32
    %20 = arith.cmpi ne, %19, %c0_i32_19 : i32
    scf.if %20 {
      %c0_20 = arith.constant 0 : index
      %c0_21 = arith.constant 0 : index
      %21 = vector.load %arg7[%c0_20, %c0_21] : memref<2x128xf32, #tpu.memory_space<vmem>>, vector<2x128xf32>
      %c0_22 = arith.constant 0 : index
      %c0_23 = arith.constant 0 : index
      %22 = vector.load %arg8[%c0_22, %c0_23] : memref<2x128xf32, #tpu.memory_space<vmem>>, vector<2x128xf32>
      %23 = arith.addf %21, %22 : vector<2x128xf32>
      %cst_24 = arith.constant 5.000000e-01 : f32
      %24 = vector.broadcast %cst_24 : f32 to vector<2x128xf32>
      %25 = arith.mulf %23, %24 : vector<2x128xf32>
      %c0_25 = arith.constant 0 : index
      %c0_26 = arith.constant 0 : index
      %26 = vector.load %arg16[%c0_25, %c0_26] : memref<2x128xf32, #tpu.memory_space<vmem>>, vector<2x128xf32>
      tpu.vector_store %arg16[%c0_25, %c0_26], %25 {strides = array<i32>} : memref<2x128xf32, #tpu.memory_space<vmem>>, vector<2x128xf32>,
      %c0_27 = arith.constant 0 : index
      %c0_28 = arith.constant 0 : index
      %27 = vector.load %arg9[%c0_27, %c0_28] : memref<2x128xf32, #tpu.memory_space<vmem>>, vector<2x128xf32>
      %c0_29 = arith.constant 0 : index
      %c0_30 = arith.constant 0 : index
      %28 = vector.load %arg10[%c0_29, %c0_30] : memref<2x128xf32, #tpu.memory_space<vmem>>, vector<2x128xf32>
      %29 = arith.addf %27, %28 : vector<2x128xf32>
      %cst_31 = arith.constant 5.000000e-01 : f32
      %30 = vector.broadcast %cst_31 : f32 to vector<2x128xf32>
      %31 = arith.mulf %29, %30 : vector<2x128xf32>
      %c0_32 = arith.constant 0 : index
      %c0_33 = arith.constant 0 : index
      %32 = vector.load %arg17[%c0_32, %c0_33] : memref<2x128xf32, #tpu.memory_space<vmem>>, vector<2x128xf32>
      tpu.vector_store %arg17[%c0_32, %c0_33], %31 {strides = array<i32>} : memref<2x128xf32, #tpu.memory_space<vmem>>, vector<2x128xf32>,
      %c0_34 = arith.constant 0 : index
      %c0_35 = arith.constant 0 : index
      %33 = vector.load %arg11[%c0_34, %c0_35] : memref<2x128xf32, #tpu.memory_space<vmem>>, vector<2x128xf32>
      %c0_36 = arith.constant 0 : index
      %c0_37 = arith.constant 0 : index
      %34 = vector.load %arg12[%c0_36, %c0_37] : memref<2x128xf32, #tpu.memory_space<vmem>>, vector<2x128xf32>
      %35 = arith.addf %33, %34 : vector<2x128xf32>
      %cst_38 = arith.constant 5.000000e-01 : f32
      %36 = vector.broadcast %cst_38 : f32 to vector<2x128xf32>
      %37 = arith.mulf %35, %36 : vector<2x128xf32>
      %c0_39 = arith.constant 0 : index
      %c0_40 = arith.constant 0 : index
      %38 = vector.load %arg18[%c0_39, %c0_40] : memref<2x128xf32, #tpu.memory_space<vmem>>, vector<2x128xf32>
      tpu.vector_store %arg18[%c0_39, %c0_40], %37 {strides = array<i32>} : memref<2x128xf32, #tpu.memory_space<vmem>>, vector<2x128xf32>,
    } else {
    }
    return
  }
  func.func @transform_0(%arg0: i32) -> (i32, i32) {
    %c0_i32 = arith.constant 0 : i32
    %c0_i32_0 = arith.constant 0 : i32
    return %arg0, %c0_i32 : i32, i32
  }
  func.func @transform_1(%arg0: i32) -> (i32, i32) {
    %c0_i32 = arith.constant 0 : i32
    %c0_i32_0 = arith.constant 0 : i32
    return %arg0, %c0_i32 : i32, i32
  }
  func.func @transform_2(%arg0: i32) -> (i32, i32) {
    %c0_i32 = arith.constant 0 : i32
    %c0_i32_0 = arith.constant 0 : i32
    return %arg0, %c0_i32 : i32, i32
  }
  func.func @transform_3(%arg0: i32) -> (i32, i32) {
    %c0_i32 = arith.constant 0 : i32
    %c0_i32_0 = arith.constant 0 : i32
    return %arg0, %c0_i32 : i32, i32
  }
  func.func @transform_4(%arg0: i32) -> (i32, i32) {
    %c0_i32 = arith.constant 0 : i32
    %c0_i32_0 = arith.constant 0 : i32
    return %arg0, %c0_i32 : i32, i32
  }
  func.func @transform_5(%arg0: i32) -> (i32, i32) {
    %c0_i32 = arith.constant 0 : i32
    %c0_i32_0 = arith.constant 0 : i32
    return %arg0, %c0_i32 : i32, i32
  }
  func.func @transform_6(%arg0: i32) -> (i32, i32) {
    %c0_i32 = arith.constant 0 : i32
    %c0_i32_0 = arith.constant 0 : i32
    %c0_i32_1 = arith.constant 0 : i32
    return %c0_i32, %c0_i32_0 : i32, i32
  }
  func.func @transform_7(%arg0: i32) -> (i32, i32) {
    %c0_i32 = arith.constant 0 : i32
    %c0_i32_0 = arith.constant 0 : i32
    %c0_i32_1 = arith.constant 0 : i32
    return %c0_i32, %c0_i32_0 : i32, i32
  }
  func.func @transform_8(%arg0: i32) -> (i32, i32) {
    %c0_i32 = arith.constant 0 : i32
    %c0_i32_0 = arith.constant 0 : i32
    %c0_i32_1 = arith.constant 0 : i32
    return %c0_i32, %c0_i32_0 : i32, i32
  }
  func.func @transform_9(%arg0: i32) -> (i32, i32) {
    %c0_i32 = arith.constant 0 : i32
    %c0_i32_0 = arith.constant 0 : i32
    %c0_i32_1 = arith.constant 0 : i32
    return %c0_i32, %c0_i32_0 : i32, i32
  }
  func.func @transform_10(%arg0: i32) -> (i32, i32) {
    %c0_i32 = arith.constant 0 : i32
    %c0_i32_0 = arith.constant 0 : i32
    %c0_i32_1 = arith.constant 0 : i32
    return %c0_i32, %c0_i32_0 : i32, i32
  }
  func.func @transform_11(%arg0: i32) -> (i32, i32) {
    %c0_i32 = arith.constant 0 : i32
    %c0_i32_0 = arith.constant 0 : i32
    %c0_i32_1 = arith.constant 0 : i32
    return %c0_i32, %c0_i32_0 : i32, i32
  }
  func.func @transform_12(%arg0: i32) -> (i32, i32) {
    %c0_i32 = arith.constant 0 : i32
    %c0_i32_0 = arith.constant 0 : i32
    return %arg0, %c0_i32 : i32, i32
  }
  func.func @transform_13(%arg0: i32) -> (i32, i32) {
    %c0_i32 = arith.constant 0 : i32
    %c0_i32_0 = arith.constant 0 : i32
    return %arg0, %c0_i32 : i32, i32
  }
  func.func @transform_14(%arg0: i32) -> (i32, i32) {
    %c0_i32 = arith.constant 0 : i32
    %c0_i32_0 = arith.constant 0 : i32
    return %arg0, %c0_i32 : i32, i32
  }
  func.func @transform_15(%arg0: i32) -> (i32, i32) {
    %c0_i32 = arith.constant 0 : i32
    %c0_i32_0 = arith.constant 0 : i32
    %c0_i32_1 = arith.constant 0 : i32
    return %c0_i32, %c0_i32_0 : i32, i32
  }
  func.func @transform_16(%arg0: i32) -> (i32, i32) {
    %c0_i32 = arith.constant 0 : i32
    %c0_i32_0 = arith.constant 0 : i32
    %c0_i32_1 = arith.constant 0 : i32
    return %c0_i32, %c0_i32_0 : i32, i32
  }
  func.func @transform_17(%arg0: i32) -> (i32, i32) {
    %c0_i32 = arith.constant 0 : i32
    %c0_i32_0 = arith.constant 0 : i32
    %c0_i32_1 = arith.constant 0 : i32
    return %c0_i32, %c0_i32_0 : i32, i32
  }
}

</mosaic_0001>

<llo_original>
// kernel: tpu_custom_call.1
$region0: #{tpu_custom_call.1}
  #allocation0 [shape = 'u32[]', space=smem, size = 0x4, offset = 0x4, fixed_abs, tag = 'smem constant byte address 0x4 - core index']
  #allocation1 [shape = 'u32[144,128]{1,0:T(1,128)}', space=vmem, size = 0x12000, scoped, tag = 'internal scratch']
  %s0 = inlined_call_operand.hbm [shape: f32[32,128], index: 0, kind: input, shape index: {}]
  %s1 = inlined_call_operand.hbm [shape: f32[32,128], index: 1, kind: input, shape index: {}]
  %s2 = inlined_call_operand.hbm [shape: f32[32,128], index: 2, kind: input, shape index: {}]
  %s3 = inlined_call_operand.hbm [shape: f32[32,128], index: 3, kind: input, shape index: {}]
  %s4 = inlined_call_operand.hbm [shape: f32[32,128], index: 4, kind: input, shape index: {}]
  %s5 = inlined_call_operand.hbm [shape: f32[32,128], index: 5, kind: input, shape index: {}]
  %s6 = inlined_call_operand.vmem [shape: f32[2,128], index: 6, kind: input, shape index: {}]
  %s7 = inlined_call_operand.vmem [shape: f32[2,128], index: 7, kind: input, shape index: {}]
  %s8 = inlined_call_operand.vmem [shape: f32[2,128], index: 8, kind: input, shape index: {}]
  %s9 = inlined_call_operand.vmem [shape: f32[2,128], index: 9, kind: input, shape index: {}]
  %s10 = inlined_call_operand.vmem [shape: f32[2,128], index: 10, kind: input, shape index: {}]
  %s11 = inlined_call_operand.vmem [shape: f32[2,128], index: 11, kind: input, shape index: {}]
  %s12 = inlined_call_operand.hbm [shape: f32[32,128], index: 12, kind: output, shape index: {0}]
  %s13 = inlined_call_operand.hbm [shape: f32[32,128], index: 13, kind: output, shape index: {1}]
  %s14 = inlined_call_operand.hbm [shape: f32[32,128], index: 14, kind: output, shape index: {2}]
  %s15 = inlined_call_operand.hbm [shape: f32[2,128], index: 15, kind: output, shape index: {3}]
  %s16 = inlined_call_operand.hbm [shape: f32[2,128], index: 16, kind: output, shape index: {4}]
  %s17 = inlined_call_operand.hbm [shape: f32[2,128], index: 17, kind: output, shape index: {5}]
  %18 = xla_tuple %s12, %s13, %s14, %s15, %s16, %s17
  %s19 = sld [smem:[#allocation0]]
  $region126: #{tpu_custom_call.1} parent=0
    _
  %s21 = ssub.s32 1, %s19
  %s22 = scalar_select 0, %s21, %s19
  $region1: #{tpu_custom_call.1} parent=0
    #allocation2 [shape = 'u8[16384]{0}', space=vmem, size = 0x4000, scoped, tag = 'input window, operand 0, single buffered']
    #allocation3 [shape = 's32[1]{0}', space=sflag, size = 0x4, scoped, tag = 'scoped memory for tpu_custom_call.1']
    #allocation4 [shape = 's32[1]{0}', space=sflag, size = 0x4, scoped, tag = 'scoped memory for tpu_custom_call.1']
    #allocation5 [shape = 'u8[16384]{0}', space=vmem, size = 0x4000, scoped, tag = 'input window, operand 1, single buffered']
    #allocation6 [shape = 's32[1]{0}', space=sflag, size = 0x4, scoped, tag = 'scoped memory for tpu_custom_call.1']
    #allocation7 [shape = 'u8[16384]{0}', space=vmem, size = 0x4000, scoped, tag = 'input window, operand 2, single buffered']
    #allocation8 [shape = 'u8[16384]{0}', space=vmem, size = 0x4000, scoped, tag = 'input window, operand 3, single buffered']
    #allocation9 [shape = 's32[1]{0}', space=sflag, size = 0x4, scoped, tag = 'scoped memory for tpu_custom_call.1']
    #allocation10 [shape = 'u8[16384]{0}', space=vmem, size = 0x4000, scoped, tag = 'input window, operand 4, single buffered']
    #allocation11 [shape = 'u8[16384]{0}', space=vmem, size = 0x4000, scoped, tag = 'input window, operand 5, single buffered']
    #allocation12 [shape = 's32[1]{0}', space=sflag, size = 0x4, scoped, tag = 'scoped memory for tpu_custom_call.1']
    #allocation13 [shape = 'u8[16384]{0}', space=vmem, size = 0x4000, scoped, tag = 'output window, operand 0, single buffered']
    #allocation14 [shape = 'u8[16384]{0}', space=vmem, size = 0x4000, scoped, tag = 'output window, operand 1, single buffered']
    #allocation15 [shape = 's32[1]{0}', space=sflag, size = 0x4, scoped, tag = 'scoped memory for tpu_custom_call.1']
    #allocation16 [shape = 'u8[16384]{0}', space=vmem, size = 0x4000, scoped, tag = 'output window, operand 2, single buffered']
    #allocation17 [shape = 'u8[1024]{0}', space=vmem, size = 0x400, scoped, tag = 'output window, operand 3, single buffered']
    #allocation18 [shape = 's32[1]{0}', space=sflag, size = 0x4, scoped, tag = 'scoped memory for tpu_custom_call.1']
    #allocation19 [shape = 'u8[1024]{0}', space=vmem, size = 0x400, scoped, tag = 'output window, operand 4, single buffered']
    #allocation20 [shape = 'u8[1024]{0}', space=vmem, size = 0x400, scoped, tag = 'output window, operand 5, single buffered']
    #allocation21 [shape = 's32[1]{0}', space=sflag, size = 0x4, scoped, tag = 'scoped memory for tpu_custom_call.1']
    %23 = vsyncpa [#allocation3], 0
    %24 = vsyncpa [#allocation6], 0
    %25 = vsyncpa [#allocation9], 0
    %26 = vsyncpa [#allocation12], 0
    %27 = vsyncpa [#allocation4], 0
    %28 = vsyncpa [#allocation15], 0
    %29 = vsyncpa [#allocation18], 0
    %30 = vsyncpa [#allocation21], 0
    // Predicated region
    $region2: #{tpu_custom_call.1} parent=1 // pred_check
      _
    $region3: #{tpu_custom_call.1} parent=1 // pred_check_branch
      %32 = sbr.rel (0) target = $region5
    $region4: #{tpu_custom_call.1} parent=1 // pred_region
      %s34 = ssub.s32 512, 512
      %35 = vsyncadd [#allocation3], %s34
      %s36 = sshll.u32 [#allocation2], 4
      %s37 = int_to_ptr.vmem [resolvable:$true] %s36
      %42 = dma.hbm_to_vmem [thread:$0]  %s0, 512, %s37, [#allocation3], 128, 128, 8
    $region5: #{tpu_custom_call.1} parent=1 // pred_fallthru
      _
    // Predicated region
    $region6: #{tpu_custom_call.1} parent=1 // pred_check
      _
    $region7: #{tpu_custom_call.1} parent=1 // pred_check_branch
      %44 = sbr.rel (0) target = $region9
    $region8: #{tpu_custom_call.1} parent=1 // pred_region
      %s46 = ssub.s32 512, 512
      %47 = vsyncadd [#allocation6], %s46
      %s48 = sshll.u32 [#allocation5], 4
      %s49 = int_to_ptr.vmem [resolvable:$true] %s48
      %54 = dma.hbm_to_vmem [thread:$0]  %s1, 512, %s49, [#allocation6], 128, 128, 8
    $region9: #{tpu_custom_call.1} parent=1 // pred_fallthru
      _
    // Predicated region
    $region10: #{tpu_custom_call.1} parent=1 // pred_check
      _
    $region11: #{tpu_custom_call.1} parent=1 // pred_check_branch
      %56 = sbr.rel (0) target = $region13
    $region12: #{tpu_custom_call.1} parent=1 // pred_region
      %s58 = ssub.s32 512, 512
      %59 = vsyncadd [#allocation6], %s58
      %s60 = sshll.u32 [#allocation7], 4
      %s61 = int_to_ptr.vmem [resolvable:$true] %s60
      %66 = dma.hbm_to_vmem [thread:$0]  %s2, 512, %s61, [#allocation6], 128, 128, 8
    $region13: #{tpu_custom_call.1} parent=1 // pred_fallthru
      _
    // Predicated region
    $region14: #{tpu_custom_call.1} parent=1 // pred_check
      _
    $region15: #{tpu_custom_call.1} parent=1 // pred_check_branch
      %68 = sbr.rel (0) target = $region17
    $region16: #{tpu_custom_call.1} parent=1 // pred_region
      %s70 = ssub.s32 512, 512
      %71 = vsyncadd [#allocation9], %s70
      %s72 = sshll.u32 [#allocation8], 4
      %s73 = int_to_ptr.vmem [resolvable:$true] %s72
      %78 = dma.hbm_to_vmem [thread:$0]  %s3, 512, %s73, [#allocation9], 128, 128, 8
    $region17: #{tpu_custom_call.1} parent=1 // pred_fallthru
      _
    // Predicated region
    $region18: #{tpu_custom_call.1} parent=1 // pred_check
      _
    $region19: #{tpu_custom_call.1} parent=1 // pred_check_branch
      %80 = sbr.rel (0) target = $region21
    $region20: #{tpu_custom_call.1} parent=1 // pred_region
      %s82 = ssub.s32 512, 512
      %83 = vsyncadd [#allocation9], %s82
      %s84 = sshll.u32 [#allocation10], 4
      %s85 = int_to_ptr.vmem [resolvable:$true] %s84
      %90 = dma.hbm_to_vmem [thread:$0]  %s4, 512, %s85, [#allocation9], 128, 128, 8
    $region21: #{tpu_custom_call.1} parent=1 // pred_fallthru
      _
    // Predicated region
    $region22: #{tpu_custom_call.1} parent=1 // pred_check
      _
    $region23: #{tpu_custom_call.1} parent=1 // pred_check_branch
      %92 = sbr.rel (0) target = $region25
    $region24: #{tpu_custom_call.1} parent=1 // pred_region
      %s94 = ssub.s32 512, 512
      %95 = vsyncadd [#allocation12], %s94
      %s96 = sshll.u32 [#allocation11], 4
      %s97 = int_to_ptr.vmem [resolvable:$true] %s96
      %102 = dma.hbm_to_vmem [thread:$0]  %s5, 512, %s97, [#allocation12], 128, 128, 8
    $region25: #{tpu_custom_call.1} parent=1 // pred_fallthru
      _
    // Predicated region
    $region26: #{tpu_custom_call.1} parent=1 // pred_check
      _
    $region27: #{tpu_custom_call.1} parent=1 // pred_check_branch
      %104 = sbr.rel (0) target = $region29
    $region28: #{tpu_custom_call.1} parent=1 // pred_region
      _
    $region29: #{tpu_custom_call.1} parent=1 // pred_fallthru
      _
    // Predicated region
    $region30: #{tpu_custom_call.1} parent=1 // pred_check
      _
    $region31: #{tpu_custom_call.1} parent=1 // pred_check_branch
      %106 = sbr.rel (0) target = $region33
    $region32: #{tpu_custom_call.1} parent=1 // pred_region
      _
    $region33: #{tpu_custom_call.1} parent=1 // pred_fallthru
      _
    // Predicated region
    $region34: #{tpu_custom_call.1} parent=1 // pred_check
      _
    $region35: #{tpu_custom_call.1} parent=1 // pred_check_branch
      %108 = sbr.rel (0) target = $region37
    $region36: #{tpu_custom_call.1} parent=1 // pred_region
      _
    $region37: #{tpu_custom_call.1} parent=1 // pred_fallthru
      _
    // Predicated region
    $region38: #{tpu_custom_call.1} parent=1 // pred_check
      _
    $region39: #{tpu_custom_call.1} parent=1 // pred_check_branch
      %110 = sbr.rel (0) target = $region41
    $region40: #{tpu_custom_call.1} parent=1 // pred_region
      _
    $region41: #{tpu_custom_call.1} parent=1 // pred_fallthru
      _
    // Predicated region
    $region42: #{tpu_custom_call.1} parent=1 // pred_check
      _
    $region43: #{tpu_custom_call.1} parent=1 // pred_check_branch
      %112 = sbr.rel (0) target = $region45
    $region44: #{tpu_custom_call.1} parent=1 // pred_region
      _
    $region45: #{tpu_custom_call.1} parent=1 // pred_fallthru
      _
    // Predicated region
    $region46: #{tpu_custom_call.1} parent=1 // pred_check
      _
    $region47: #{tpu_custom_call.1} parent=1 // pred_check_branch
      %114 = sbr.rel (0) target = $region49
    $region48: #{tpu_custom_call.1} parent=1 // pred_region
      _
    $region49: #{tpu_custom_call.1} parent=1 // pred_fallthru
      _
    // Predicated region
    $region50: #{tpu_custom_call.1} parent=1 // pred_check
      _
    $region51: #{tpu_custom_call.1} parent=1 // pred_check_branch
      %116 = sbr.rel (0) target = $region53
    $region52: #{tpu_custom_call.1} parent=1 // pred_region
      %117 = dma.done [#allocation3], 512
    $region53: #{tpu_custom_call.1} parent=1 // pred_fallthru
      _
    // Predicated region
    $region54: #{tpu_custom_call.1} parent=1 // pred_check
      _
    $region55: #{tpu_custom_call.1} parent=1 // pred_check_branch
      %119 = sbr.rel (0) target = $region57
    $region56: #{tpu_custom_call.1} parent=1 // pred_region
      %120 = dma.done [#allocation6], 512
    $region57: #{tpu_custom_call.1} parent=1 // pred_fallthru
      _
    // Predicated region
    $region58: #{tpu_custom_call.1} parent=1 // pred_check
      _
    $region59: #{tpu_custom_call.1} parent=1 // pred_check_branch
      %122 = sbr.rel (0) target = $region61
    $region60: #{tpu_custom_call.1} parent=1 // pred_region
      %123 = dma.done [#allocation6], 512
    $region61: #{tpu_custom_call.1} parent=1 // pred_fallthru
      _
    // Predicated region
    $region62: #{tpu_custom_call.1} parent=1 // pred_check
      _
    $region63: #{tpu_custom_call.1} parent=1 // pred_check_branch
      %125 = sbr.rel (0) target = $region65
    $region64: #{tpu_custom_call.1} parent=1 // pred_region
      %126 = dma.done [#allocation9], 512
    $region65: #{tpu_custom_call.1} parent=1 // pred_fallthru
      _
    // Predicated region
    $region66: #{tpu_custom_call.1} parent=1 // pred_check
      _
    $region67: #{tpu_custom_call.1} parent=1 // pred_check_branch
      %128 = sbr.rel (0) target = $region69
    $region68: #{tpu_custom_call.1} parent=1 // pred_region
      %129 = dma.done [#allocation9], 512
    $region69: #{tpu_custom_call.1} parent=1 // pred_fallthru
      _
    // Predicated region
    $region70: #{tpu_custom_call.1} parent=1 // pred_check
      _
    $region71: #{tpu_custom_call.1} parent=1 // pred_check_branch
      %131 = sbr.rel (0) target = $region73
    $region72: #{tpu_custom_call.1} parent=1 // pred_region
      %132 = dma.done [#allocation12], 512
    $region73: #{tpu_custom_call.1} parent=1 // pred_fallthru
      _
    %v133 = vld [vmem:[#allocation2] sm:$0xff]
    %v134 = vld [vmem:[#allocation2 + $0x8] sm:$0xff]
    %v135 = vld [vmem:[#allocation2 + $0x10] sm:$0xff]
    %v136 = vld [vmem:[#allocation2 + $0x18] sm:$0xff]
    %v137 = vld [vmem:[#allocation5] sm:$0xff]
    %v138 = vld [vmem:[#allocation5 + $0x8] sm:$0xff]
    %v139 = vld [vmem:[#allocation5 + $0x10] sm:$0xff]
    %v140 = vld [vmem:[#allocation5 + $0x18] sm:$0xff]
    %v141 = vadd.f32 %v133, %v137
    %v142 = vadd.f32 %v134, %v138
    %v143 = vadd.f32 %v135, %v139
    %v144 = vadd.f32 %v136, %v140
    %v145 = vmul.f32 %v141, 0.5
    %v146 = vmul.f32 %v142, 0.5
    %v147 = vmul.f32 %v143, 0.5
    %v148 = vmul.f32 %v144, 0.5
    %149 = vst [vmem:[#allocation13] sm:$0xff] %v145
    %150 = vst [vmem:[#allocation13 + $0x8] sm:$0xff] %v146
    %151 = vst [vmem:[#allocation13 + $0x10] sm:$0xff] %v147
    %152 = vst [vmem:[#allocation13 + $0x18] sm:$0xff] %v148
    %v153 = vld [vmem:[#allocation7] sm:$0xff]
    %v154 = vld [vmem:[#allocation7 + $0x8] sm:$0xff]
    %v155 = vld [vmem:[#allocation7 + $0x10] sm:$0xff]
    %v156 = vld [vmem:[#allocation7 + $0x18] sm:$0xff]
    %v157 = vld [vmem:[#allocation8] sm:$0xff]
    %v158 = vld [vmem:[#allocation8 + $0x8] sm:$0xff]
    %v159 = vld [vmem:[#allocation8 + $0x10] sm:$0xff]
    %v160 = vld [vmem:[#allocation8 + $0x18] sm:$0xff]
    %v161 = vadd.f32 %v153, %v157
    %v162 = vadd.f32 %v154, %v158
    %v163 = vadd.f32 %v155, %v159
    %v164 = vadd.f32 %v156, %v160
    %v165 = vmul.f32 %v161, 0.5
    %v166 = vmul.f32 %v162, 0.5
    %v167 = vmul.f32 %v163, 0.5
    %v168 = vmul.f32 %v164, 0.5
    %169 = vst [vmem:[#allocation14] sm:$0xff] %v165
    %170 = vst [vmem:[#allocation14 + $0x8] sm:$0xff] %v166
    %171 = vst [vmem:[#allocation14 + $0x10] sm:$0xff] %v167
    %172 = vst [vmem:[#allocation14 + $0x18] sm:$0xff] %v168
    %v173 = vld [vmem:[#allocation10] sm:$0xff]
    %v174 = vld [vmem:[#allocation10 + $0x8] sm:$0xff]
    %v175 = vld [vmem:[#allocation10 + $0x10] sm:$0xff]
    %v176 = vld [vmem:[#allocation10 + $0x18] sm:$0xff]
    %v177 = vld [vmem:[#allocation11] sm:$0xff]
    %v178 = vld [vmem:[#allocation11 + $0x8] sm:$0xff]
    %v179 = vld [vmem:[#allocation11 + $0x10] sm:$0xff]
    %v180 = vld [vmem:[#allocation11 + $0x18] sm:$0xff]
    %v181 = vadd.f32 %v173, %v177
    %v182 = vadd.f32 %v174, %v178
    %v183 = vadd.f32 %v175, %v179
    %v184 = vadd.f32 %v176, %v180
    %v185 = vmul.f32 %v181, 0.5
    %v186 = vmul.f32 %v182, 0.5
    %v187 = vmul.f32 %v183, 0.5
    %v188 = vmul.f32 %v184, 0.5
    %189 = vst [vmem:[#allocation16] sm:$0xff] %v185
    %190 = vst [vmem:[#allocation16 + $0x8] sm:$0xff] %v186
    %191 = vst [vmem:[#allocation16 + $0x10] sm:$0xff] %v187
    %192 = vst [vmem:[#allocation16 + $0x18] sm:$0xff] %v188
    %p193 = scmp.eq.s32.totalorder 0, 0
    // Predicated region
    $region74: #{tpu_custom_call.1} parent=1 // pred_check
      %p194 = pneg %p193
    $region75: #{tpu_custom_call.1} parent=1 // pred_check_branch
      %196 = sbr.rel (%p194) target = $region77
    $region76: #{tpu_custom_call.1} parent=1 // pred_region
      %v197 = vld [vmem:[%s6] sm:$0x3]
      %v198 = vld [vmem:[%s7] sm:$0x3]
      %v199 = vadd.f32 %v197, %v198
      %v200 = vmul.f32 %v199, 0.5
      %201 = vst [vmem:[#allocation17] sm:$0x3] %v200
      %v202 = vld [vmem:[%s8] sm:$0x3]
      %v203 = vld [vmem:[%s9] sm:$0x3]
      %v204 = vadd.f32 %v202, %v203
      %v205 = vmul.f32 %v204, 0.5
      %206 = vst [vmem:[#allocation19] sm:$0x3] %v205
      %v207 = vld [vmem:[%s10] sm:$0x3]
      %v208 = vld [vmem:[%s11] sm:$0x3]
      %v209 = vadd.f32 %v207, %v208
      %v210 = vmul.f32 %v209, 0.5
      %211 = vst [vmem:[#allocation20] sm:$0x3] %v210
    $region77: #{tpu_custom_call.1} parent=1 // pred_fallthru
      _
    // Predicated region
    $region78: #{tpu_custom_call.1} parent=1 // pred_check
      _
    $region79: #{tpu_custom_call.1} parent=1 // pred_check_branch
      %213 = sbr.rel (0) target = $region81
    $region80: #{tpu_custom_call.1} parent=1 // pred_region
      %s215 = ssub.s32 512, 512
      %216 = vsyncadd [#allocation4], %s215
      %s217 = sshll.u32 [#allocation13], 4
      %s218 = int_to_ptr.vmem [resolvable:$true] %s217
      %223 = dma.vmem_to_hbm [thread:$0]  %s218, 512, %s12, [#allocation4], 128, 128, 8
    $region81: #{tpu_custom_call.1} parent=1 // pred_fallthru
      _
    // Predicated region
    $region82: #{tpu_custom_call.1} parent=1 // pred_check
      _
    $region83: #{tpu_custom_call.1} parent=1 // pred_check_branch
      %225 = sbr.rel (0) target = $region85
    $region84: #{tpu_custom_call.1} parent=1 // pred_region
      %s227 = ssub.s32 512, 512
      %228 = vsyncadd [#allocation15], %s227
      %s229 = sshll.u32 [#allocation14], 4
      %s230 = int_to_ptr.vmem [resolvable:$true] %s229
      %235 = dma.vmem_to_hbm [thread:$0]  %s230, 512, %s13, [#allocation15], 128, 128, 8
    $region85: #{tpu_custom_call.1} parent=1 // pred_fallthru
      _
    // Predicated region
    $region86: #{tpu_custom_call.1} parent=1 // pred_check
      _
    $region87: #{tpu_custom_call.1} parent=1 // pred_check_branch
      %237 = sbr.rel (0) target = $region89
    $region88: #{tpu_custom_call.1} parent=1 // pred_region
      %s239 = ssub.s32 512, 512
      %240 = vsyncadd [#allocation15], %s239
      %s241 = sshll.u32 [#allocation16], 4
      %s242 = int_to_ptr.vmem [resolvable:$true] %s241
      %247 = dma.vmem_to_hbm [thread:$0]  %s242, 512, %s14, [#allocation15], 128, 128, 8
    $region89: #{tpu_custom_call.1} parent=1 // pred_fallthru
      _
    // Predicated region
    $region90: #{tpu_custom_call.1} parent=1 // pred_check
      _
    $region91: #{tpu_custom_call.1} parent=1 // pred_check_branch
      %249 = sbr.rel (0) target = $region93
    $region92: #{tpu_custom_call.1} parent=1 // pred_region
      %s251 = ssub.s32 32, 32
      %252 = vsyncadd [#allocation18], %s251
      %s254 = sshll.u32 [#allocation17], 4
      %s255 = int_to_ptr.vmem [resolvable:$true] %s254
      %257 = dma.vmem_to_hbm [thread:$0]  %s255, 32, %s15, [#allocation18]
    $region93: #{tpu_custom_call.1} parent=1 // pred_fallthru
      _
    // Predicated region
    $region94: #{tpu_custom_call.1} parent=1 // pred_check
      _
    $region95: #{tpu_custom_call.1} parent=1 // pred_check_branch
      %259 = sbr.rel (0) target = $region97
    $region96: #{tpu_custom_call.1} parent=1 // pred_region
      %s261 = ssub.s32 32, 32
      %262 = vsyncadd [#allocation18], %s261
      %s264 = sshll.u32 [#allocation19], 4
      %s265 = int_to_ptr.vmem [resolvable:$true] %s264
      %267 = dma.vmem_to_hbm [thread:$0]  %s265, 32, %s16, [#allocation18]
    $region97: #{tpu_custom_call.1} parent=1 // pred_fallthru
      _
    // Predicated region
    $region98: #{tpu_custom_call.1} parent=1 // pred_check
      _
    $region99: #{tpu_custom_call.1} parent=1 // pred_check_branch
      %269 = sbr.rel (0) target = $region101
    $region100: #{tpu_custom_call.1} parent=1 // pred_region
      %s271 = ssub.s32 32, 32
      %272 = vsyncadd [#allocation21], %s271
      %s274 = sshll.u32 [#allocation20], 4
      %s275 = int_to_ptr.vmem [resolvable:$true] %s274
      %277 = dma.vmem_to_hbm [thread:$0]  %s275, 32, %s17, [#allocation21]
    $region101: #{tpu_custom_call.1} parent=1 // pred_fallthru
      _
    // Predicated region
    $region102: #{tpu_custom_call.1} parent=1 // pred_check
      _
    $region103: #{tpu_custom_call.1} parent=1 // pred_check_branch
      %279 = sbr.rel (0) target = $region105
    $region104: #{tpu_custom_call.1} parent=1 // pred_region
      %280 = dma.done [#allocation4], 512
    $region105: #{tpu_custom_call.1} parent=1 // pred_fallthru
      _
    // Predicated region
    $region106: #{tpu_custom_call.1} parent=1 // pred_check
      _
    $region107: #{tpu_custom_call.1} parent=1 // pred_check_branch
      %282 = sbr.rel (0) target = $region109
    $region108: #{tpu_custom_call.1} parent=1 // pred_region
      %283 = dma.done [#allocation15], 512
    $region109: #{tpu_custom_call.1} parent=1 // pred_fallthru
      _
    // Predicated region
    $region110: #{tpu_custom_call.1} parent=1 // pred_check
      _
    $region111: #{tpu_custom_call.1} parent=1 // pred_check_branch
      %285 = sbr.rel (0) target = $region113
    $region112: #{tpu_custom_call.1} parent=1 // pred_region
      %286 = dma.done [#allocation15], 512
    $region113: #{tpu_custom_call.1} parent=1 // pred_fallthru
      _
    // Predicated region
    $region114: #{tpu_custom_call.1} parent=1 // pred_check
      _
    $region115: #{tpu_custom_call.1} parent=1 // pred_check_branch
      %288 = sbr.rel (0) target = $region117
    $region116: #{tpu_custom_call.1} parent=1 // pred_region
      %289 = dma.done [#allocation18], 32
    $region117: #{tpu_custom_call.1} parent=1 // pred_fallthru
      _
    // Predicated region
    $region118: #{tpu_custom_call.1} parent=1 // pred_check
      _
    $region119: #{tpu_custom_call.1} parent=1 // pred_check_branch
      %291 = sbr.rel (0) target = $region121
    $region120: #{tpu_custom_call.1} parent=1 // pred_region
      %292 = dma.done [#allocation18], 32
    $region121: #{tpu_custom_call.1} parent=1 // pred_fallthru
      _
    // Predicated region
    $region122: #{tpu_custom_call.1} parent=1 // pred_check
      _
    $region123: #{tpu_custom_call.1} parent=1 // pred_check_branch
      %294 = sbr.rel (0) target = $region125
    $region124: #{tpu_custom_call.1} parent=1 // pred_region
      %295 = dma.done [#allocation21], 32
    $region125: #{tpu_custom_call.1} parent=1 // pred_fallthru
      _
    %296 = vsyncpa [#allocation3], 1
    %297 = vsyncpa [#allocation6], 1
    %298 = vsyncpa [#allocation9], 1
    %299 = vsyncpa [#allocation12], 1
    %300 = vsyncpa [#allocation4], 1
    %301 = vsyncpa [#allocation15], 1
    %302 = vsyncpa [#allocation18], 1
    %303 = vsyncpa [#allocation21], 1

</llo_original>
